<compile_context>
chip_gen: v7x
topology: tpu7x:2x2x1
jax: 0.10.0
libtpu: 0.0.40
codegen_flags: <defaults>
</compile_context>

<pallas_src>
import functools

import jax
import jax.numpy as jnp
from jax import lax
from jax.experimental import pallas as pl
from jax.experimental.pallas import tpu as pltpu


LANES = 128
MAX_TILE_ROWS = 8192   # 8192 * 128 * 4 B = 4 MiB per f32 input tile (per buffer)
NUM_CORES = 2          # v7x megacore split; serial (and harmless) on v5e/v6e


def _beta_vae_loss_kernel(x_ref, xh_ref, mu_ref, ls_ref,
                          sse_out_ref, kl_out_ref, acc_ref, *,
                          tile_rows, steps_per_core, full_blocks, padded_rows):
    c = pl.program_id(0)            # core (parallel) axis
    i = pl.program_id(1)            # streaming (arbitrary) axis
    step = c * steps_per_core + i   # logical row-block index

    # --- per-core init of the small accumulator ---
    @pl.when(i == 0)
    def _():
        acc_ref[...] = jnp.zeros_like(acc_ref)

    # --- one-shot KL term (tiny, resident latents), core 0 only ---
    @pl.when(jnp.logical_and(c == 0, i == 0))
    def _():
        mu = mu_ref[...].astype(jnp.float32)
        ls = ls_ref[...].astype(jnp.float32)
        # zero-padded entries give -0.5 * (0 - exp(0) + 1 + 0) = 0.
        kl_elem = -0.5 * (-(mu * mu) - jnp.exp(ls) + 1.0 + ls)
        kl_out_ref[...] = jnp.sum(kl_elem.reshape(-1, 8, LANES), axis=0)

    # --- steady state: squared error folded into the (8,128) accumulator ---
    d = xh_ref[...].astype(jnp.float32) - x_ref[...].astype(jnp.float32)
    sq = d * d

    @pl.when(step < full_blocks)            # fully-valid tile: no masking
    def _():
        acc_ref[...] += jnp.sum(sq.reshape(-1, 8, LANES), axis=0)

    @pl.when(step >= full_blocks)           # ragged / phantom tile: mask rows
    def _():
        limit = padded_rows - step * tile_rows   # valid rows in this tile (<=0 ok)
        row = lax.broadcasted_iota(jnp.int32, (tile_rows, LANES), 0)
        masked = jnp.where(row < limit, sq, 0.0)
        acc_ref[...] += jnp.sum(masked.reshape(-1, 8, LANES), axis=0)

    # --- per-core finalize: dump the partial sums ---
    @pl.when(i == pl.num_programs(1) - 1)
    def _():
        sse_out_ref[...] = acc_ref[...]


def _row_granule(dtype):
    # 8 sublanes for 32-bit, 16 for 16-bit, 32 for 8-bit packing.
    return max(8, 32 // jnp.dtype(dtype).itemsize)


def _ceil_to(a, b):
    return -(-a // b) * b


def _to_lane_slab(a, padded_rows):
    """Flatten `a` (dtype preserved), zero-pad to padded_rows*LANES, reshape."""
    flat = a.reshape(-1)
    pad = padded_rows * LANES - flat.shape[0]
    if pad:
        # TODO(synk): for very large inputs whose size is not a multiple of the
        # 8/16-row granule this pad is still a full HBM copy; a tail-split
        # (kernel on the aligned prefix + tiny JAX tail) would avoid it.
        flat = jnp.pad(flat, (0, pad))
    return flat.reshape(padded_rows, LANES)


def beta_vae_loss(x, x_hat, z_mu, z_log_sigma_sq, beta=1.0):
    """MSELoss(x_hat, x) + beta * mean(-0.5*(-mu^2 - exp(ls) + 1 + ls))."""
    n_x = int(x.size)
    n_z = int(z_mu.size)

    # Big image tensors -> lane-dense slabs, padded only to the row granule.
    granule = max(_row_granule(x.dtype), _row_granule(x_hat.dtype))
    rows_x = -(-n_x // LANES)
    padded_rows = _ceil_to(rows_x, granule)

    tile_rows = min(MAX_TILE_ROWS, padded_rows)
    total_blocks = -(-padded_rows // tile_rows)       # blocks actually needed
    full_blocks = padded_rows // tile_rows            # blocks with no ragged tail
    steps_per_core = -(-total_blocks // NUM_CORES)
    last_block = total_blocks - 1

    x_slab = _to_lane_slab(x, padded_rows)
    xh_slab = _to_lane_slab(x_hat, padded_rows)

    # Tiny latents: single resident lane-dense block.
    z_granule = max(_row_granule(z_mu.dtype), _row_granule(z_log_sigma_sq.dtype))
    rows_z = _ceil_to(max(1, -(-n_z // LANES)), z_granule)
    mu_slab = _to_lane_slab(z_mu, rows_z)
    ls_slab = _to_lane_slab(z_log_sigma_sq, rows_z)

    def row_block(c, i):
        # Clamp so a phantom step (only when total_blocks is odd / ==1) never
        # DMAs out of bounds; its contribution is masked to zero in-kernel.
        return (jnp.minimum(c * steps_per_core + i, last_block), 0)

    kernel = functools.partial(
        _beta_vae_loss_kernel,
        tile_rows=tile_rows, steps_per_core=steps_per_core,
        full_blocks=full_blocks, padded_rows=padded_rows)

    out_sse, out_kl = pl.pallas_call(
        kernel,
        out_shape=(
            jax.ShapeDtypeStruct((NUM_CORES, 8, LANES), jnp.float32),
            jax.ShapeDtypeStruct((NUM_CORES, 8, LANES), jnp.float32),
        ),
        grid_spec=pltpu.PrefetchScalarGridSpec(
            num_scalar_prefetch=0,
            grid=(NUM_CORES, steps_per_core),
            in_specs=[
                pl.BlockSpec((tile_rows, LANES), row_block),
                pl.BlockSpec((tile_rows, LANES), row_block),
                pl.BlockSpec((rows_z, LANES), lambda c, i: (0, 0)),
                pl.BlockSpec((rows_z, LANES), lambda c, i: (0, 0)),
            ],
            out_specs=(
                pl.BlockSpec((None, 8, LANES), lambda c, i: (c, 0, 0)),
                pl.BlockSpec((None, 8, LANES), lambda c, i: (c, 0, 0)),
            ),
            scratch_shapes=[pltpu.VMEM((8, LANES), jnp.float32)],
        ),
        compiler_params=pltpu.CompilerParams(
            dimension_semantics=("parallel", "arbitrary"),
            vmem_limit_bytes=48 * 1024 * 1024,
        ),
    )(x_slab, xh_slab, mu_slab, ls_slab)

    # Combine per-core partial sums (and the one-shot KL sum) in the wrapper.
    mse = jnp.sum(out_sse) * jnp.float32(1.0 / n_x)
    kl = jnp.sum(out_kl[0]) * jnp.float32(1.0 / n_z)
    return mse + jnp.float32(beta) * kl


def beta_vae_loss_ref(x, x_hat, z_mu, z_log_sigma_sq, beta=1.0):
    mse = jnp.mean((x_hat.astype(jnp.float32) - x.astype(jnp.float32)) ** 2)
    mu = z_mu.astype(jnp.float32)
    ls = z_log_sigma_sq.astype(jnp.float32)
    kl = jnp.mean(-0.5 * (-(mu * mu) - jnp.exp(ls) + 1.0 + ls))
    return mse + beta * kl


if __name__ == "__main__":
    key = jax.random.PRNGKey(0)
    k1, k2, k3, k4, k5, k6, k7, k8 = jax.random.split(key, 8)

    # Case 1: NCHW image tensors + latents, like the PyTorch module's inputs.
    N, C, H, W = 2, 4, 16, 16
    Z = 32
    x = jax.random.normal(k1, (N, C, H, W), dtype=jnp.float32)
    x_hat = jax.random.normal(k2, (N, C, H, W), dtype=jnp.float32)
    z_mu = jax.random.normal(k3, (N, Z), dtype=jnp.float32)
    z_log_sigma_sq = jax.random.normal(k4, (N, Z), dtype=jnp.float32) * 0.1

    beta = 1.0
    loss = jax.block_until_ready(beta_vae_loss(x, x_hat, z_mu, z_log_sigma_sq, beta=beta))
    ref = beta_vae_loss_ref(x, x_hat, z_mu, z_log_sigma_sq, beta=beta)
    assert jnp.allclose(loss, ref, rtol=1e-5, atol=1e-5), (loss, ref)

    # Case 2: ragged (non-128-aligned) sizes to exercise the padded tail path.
    x2 = jax.random.normal(k5, (2, 3, 11, 13), dtype=jnp.float32)
    xh2 = jax.random.normal(k6, (2, 3, 11, 13), dtype=jnp.float32)
    mu2 = jax.random.normal(k7, (2, 20), dtype=jnp.float32)
    ls2 = jax.random.normal(k8, (2, 20), dtype=jnp.float32) * 0.1
    loss2 = jax.block_until_ready(beta_vae_loss(x2, xh2, mu2, ls2, beta=0.5))
    ref2 = beta_vae_loss_ref(x2, xh2, mu2, ls2, beta=0.5)
    assert jnp.allclose(loss2, ref2, rtol=1e-5, atol=1e-5), (loss2, ref2)

    print("KERNEL_OK")
</pallas_src>

<mosaic_0001>
module attributes {stable_mosaic.version = 11 : i64} {
  func.func @_beta_vae_loss_kernel(%arg0: i32, %arg1: i32, %arg2: memref<16x128xf32, #tpu.memory_space<vmem>>, %arg3: memref<16x128xf32, #tpu.memory_space<vmem>>, %arg4: memref<8x128xf32, #tpu.memory_space<vmem>>, %arg5: memref<8x128xf32, #tpu.memory_space<vmem>>, %arg6: memref<1x8x128xf32, #tpu.memory_space<vmem>>, %arg7: memref<1x8x128xf32, #tpu.memory_space<vmem>>, %arg8: memref<8x128xf32, #tpu.memory_space<vmem>>) attributes {dimension_semantics = [#tpu.dimension_semantics<parallel>, #tpu.dimension_semantics<arbitrary>], iteration_bounds = array<i64: 2, 1>, scalar_prefetch = 0 : i64, scratch_operands = 1 : i64, tpu.core_type = #tpu.core_type<tc>, window_params = [{transform_indices = @transform_0, window_bounds = array<i64: 16, 128>}, {transform_indices = @transform_1, window_bounds = array<i64: 16, 128>}, {pipeline_mode = #tpu.pipeline_mode<synchronous>, transform_indices = @transform_2, window_bounds = array<i64: 8, 128>}, {pipeline_mode = #tpu.pipeline_mode<synchronous>, transform_indices = @transform_3, window_bounds = array<i64: 8, 128>}, {transform_indices = @transform_4, window_bounds = array<i64: 1, 8, 128>}, {transform_indices = @transform_5, window_bounds = array<i64: 1, 8, 128>}]} {
    %c1_i32 = arith.constant 1 : i32
    %0 = arith.muli %arg0, %c1_i32 : i32
    %1 = arith.addi %0, %arg1 : i32
    %c0_i32 = arith.constant 0 : i32
    %2 = arith.cmpi eq, %arg1, %c0_i32 : i32
    %3 = arith.extui %2 : i1 to i32
    %c0_i32_0 = arith.constant 0 : i32
    %4 = arith.cmpi ne, %3, %c0_i32_0 : i32
    scf.if %4 {
      %cst = arith.constant 0.000000e+00 : f32
      %23 = vector.broadcast %cst : f32 to vector<8x128xf32>
      %c0_13 = arith.constant 0 : index
      %c0_14 = arith.constant 0 : index
      %24 = vector.load %arg8[%c0_13, %c0_14] : memref<8x128xf32, #tpu.memory_space<vmem>>, vector<8x128xf32>
      tpu.vector_store %arg8[%c0_13, %c0_14], %23 {strides = array<i32>} : memref<8x128xf32, #tpu.memory_space<vmem>>, vector<8x128xf32>,
    } else {
    }
    %c0_i32_1 = arith.constant 0 : i32
    %5 = arith.cmpi eq, %arg0, %c0_i32_1 : i32
    %c0_i32_2 = arith.constant 0 : i32
    %6 = arith.cmpi eq, %arg1, %c0_i32_2 : i32
    %7 = arith.andi %5, %6 : i1
    %8 = arith.extui %7 : i1 to i32
    %c0_i32_3 = arith.constant 0 : i32
    %9 = arith.cmpi ne, %8, %c0_i32_3 : i32
    scf.if %9 {
      %c0_13 = arith.constant 0 : index
      %c0_14 = arith.constant 0 : index
      %23 = vector.load %arg4[%c0_13, %c0_14] : memref<8x128xf32, #tpu.memory_space<vmem>>, vector<8x128xf32>
      %c0_15 = arith.constant 0 : index
      %c0_16 = arith.constant 0 : index
      %24 = vector.load %arg5[%c0_15, %c0_16] : memref<8x128xf32, #tpu.memory_space<vmem>>, vector<8x128xf32>
      %25 = arith.mulf %23, %23 : vector<8x128xf32>
      %cst = arith.constant 0.000000e+00 : f32
      %26 = vector.broadcast %cst : f32 to vector<8x128xf32>
      %27 = arith.subf %26, %25 : vector<8x128xf32>
      %28 = math.exp %24 : vector<8x128xf32>
      %29 = arith.subf %27, %28 : vector<8x128xf32>
      %cst_17 = arith.constant 1.000000e+00 : f32
      %30 = vector.broadcast %cst_17 : f32 to vector<8x128xf32>
      %31 = arith.addf %29, %30 : vector<8x128xf32>
      %32 = arith.addf %31, %24 : vector<8x128xf32>
      %cst_18 = arith.constant -5.000000e-01 : f32
      %33 = vector.broadcast %cst_18 : f32 to vector<8x128xf32>
      %34 = arith.mulf %33, %32 : vector<8x128xf32>
      %35 = vector.shape_cast %34 : vector<8x128xf32> to vector<1x8x128xf32>
      %cst_19 = arith.constant dense<0.000000e+00> : vector<8x128xf32>
      %36 = vector.multi_reduction <add>, %35, %cst_19 [0] : vector<1x8x128xf32> to vector<8x128xf32>
      %c0_20 = arith.constant 0 : index
      %c0_21 = arith.constant 0 : index
      %c0_22 = arith.constant 0 : index
      %37 = vector.load %arg7[%c0_20, %c0_21, %c0_22] : memref<1x8x128xf32, #tpu.memory_space<vmem>>, vector<1x8x128xf32>
      %38 = vector.shape_cast %37 : vector<1x8x128xf32> to vector<8x128xf32>
      %39 = vector.shape_cast %36 : vector<8x128xf32> to vector<1x8x128xf32>
      tpu.vector_store %arg7[%c0_20, %c0_21, %c0_22], %39 {strides = array<i32>} : memref<1x8x128xf32, #tpu.memory_space<vmem>>, vector<1x8x128xf32>,
    } else {
    }
    %c0 = arith.constant 0 : index
    %c0_4 = arith.constant 0 : index
    %10 = vector.load %arg3[%c0, %c0_4] : memref<16x128xf32, #tpu.memory_space<vmem>>, vector<16x128xf32>
    %c0_5 = arith.constant 0 : index
    %c0_6 = arith.constant 0 : index
    %11 = vector.load %arg2[%c0_5, %c0_6] : memref<16x128xf32, #tpu.memory_space<vmem>>, vector<16x128xf32>
    %12 = arith.subf %10, %11 : vector<16x128xf32>
    %13 = arith.mulf %12, %12 : vector<16x128xf32>
    %c1_i32_7 = arith.constant 1 : i32
    %14 = arith.cmpi slt, %1, %c1_i32_7 : i32
    %15 = arith.extui %14 : i1 to i32
    %c0_i32_8 = arith.constant 0 : i32
    %16 = arith.cmpi ne, %15, %c0_i32_8 : i32
    scf.if %16 {
      %c0_13 = arith.constant 0 : index
      %c0_14 = arith.constant 0 : index
      %23 = vector.load %arg8[%c0_13, %c0_14] : memref<8x128xf32, #tpu.memory_space<vmem>>, vector<8x128xf32>
      %24 = vector.shape_cast %13 : vector<16x128xf32> to vector<2x8x128xf32>
      %cst = arith.constant dense<0.000000e+00> : vector<8x128xf32>
      %25 = vector.multi_reduction <add>, %24, %cst [0] : vector<2x8x128xf32> to vector<8x128xf32>
      %26 = arith.addf %23, %25 : vector<8x128xf32>
      %c0_15 = arith.constant 0 : index
      %c0_16 = arith.constant 0 : index
      %27 = vector.load %arg8[%c0_15, %c0_16] : memref<8x128xf32, #tpu.memory_space<vmem>>, vector<8x128xf32>
      tpu.vector_store %arg8[%c0_15, %c0_16], %26 {strides = array<i32>} : memref<8x128xf32, #tpu.memory_space<vmem>>, vector<8x128xf32>,
    } else {
    }
    %c1_i32_9 = arith.constant 1 : i32
    %17 = arith.cmpi sge, %1, %c1_i32_9 : i32
    %18 = arith.extui %17 : i1 to i32
    %c0_i32_10 = arith.constant 0 : i32
    %19 = arith.cmpi ne, %18, %c0_i32_10 : i32
    scf.if %19 {
      %c16_i32 = arith.constant 16 : i32
      %23 = arith.muli %1, %c16_i32 : i32
      %c16_i32_13 = arith.constant 16 : i32
      %24 = arith.subi %c16_i32_13, %23 : i32
      %25 = tpu.iota {dimensions = array<i32: 0>} : vector<16x128xi32>
      %26 = vector.broadcast %24 : i32 to vector<16x128xi32>
      %27 = arith.cmpi slt, %25, %26 : vector<16x128xi32>
      %cst = arith.constant 0.000000e+00 : f32
      %28 = vector.broadcast %cst : f32 to vector<16x128xf32>
      %29 = arith.select %27, %13, %28 : vector<16x128xi1>, vector<16x128xf32>
      %c0_14 = arith.constant 0 : index
      %c0_15 = arith.constant 0 : index
      %30 = vector.load %arg8[%c0_14, %c0_15] : memref<8x128xf32, #tpu.memory_space<vmem>>, vector<8x128xf32>
      %31 = vector.shape_cast %29 : vector<16x128xf32> to vector<2x8x128xf32>
      %cst_16 = arith.constant dense<0.000000e+00> : vector<8x128xf32>
      %32 = vector.multi_reduction <add>, %31, %cst_16 [0] : vector<2x8x128xf32> to vector<8x128xf32>
      %33 = arith.addf %30, %32 : vector<8x128xf32>
      %c0_17 = arith.constant 0 : index
      %c0_18 = arith.constant 0 : index
      %34 = vector.load %arg8[%c0_17, %c0_18] : memref<8x128xf32, #tpu.memory_space<vmem>>, vector<8x128xf32>
      tpu.vector_store %arg8[%c0_17, %c0_18], %33 {strides = array<i32>} : memref<8x128xf32, #tpu.memory_space<vmem>>, vector<8x128xf32>,
    } else {
    }
    %c0_i32_11 = arith.constant 0 : i32
    %20 = arith.cmpi eq, %arg1, %c0_i32_11 : i32
    %21 = arith.extui %20 : i1 to i32
    %c0_i32_12 = arith.constant 0 : i32
    %22 = arith.cmpi ne, %21, %c0_i32_12 : i32
    scf.if %22 {
      %c0_13 = arith.constant 0 : index
      %c0_14 = arith.constant 0 : index
      %23 = vector.load %arg8[%c0_13, %c0_14] : memref<8x128xf32, #tpu.memory_space<vmem>>, vector<8x128xf32>
      %c0_15 = arith.constant 0 : index
      %c0_16 = arith.constant 0 : index
      %c0_17 = arith.constant 0 : index
      %24 = vector.load %arg6[%c0_15, %c0_16, %c0_17] : memref<1x8x128xf32, #tpu.memory_space<vmem>>, vector<1x8x128xf32>
      %25 = vector.shape_cast %24 : vector<1x8x128xf32> to vector<8x128xf32>
      %26 = vector.shape_cast %23 : vector<8x128xf32> to vector<1x8x128xf32>
      tpu.vector_store %arg6[%c0_15, %c0_16, %c0_17], %26 {strides = array<i32>} : memref<1x8x128xf32, #tpu.memory_space<vmem>>, vector<1x8x128xf32>,
    } else {
    }
    return
  }
  func.func @transform_0(%arg0: i32, %arg1: i32) -> (i32, i32) {
    %c1_i32 = arith.constant 1 : i32
    %0 = arith.muli %arg0, %c1_i32 : i32
    %1 = arith.addi %0, %arg1 : i32
    %c0_i32 = arith.constant 0 : i32
    %2 = arith.minsi %1, %c0_i32 : i32
    %c0_i32_0 = arith.constant 0 : i32
    %c0_i32_1 = arith.constant 0 : i32
    return %2, %c0_i32_0 : i32, i32
  }
  func.func @transform_1(%arg0: i32, %arg1: i32) -> (i32, i32) {
    %c1_i32 = arith.constant 1 : i32
    %0 = arith.muli %arg0, %c1_i32 : i32
    %1 = arith.addi %0, %arg1 : i32
    %c0_i32 = arith.constant 0 : i32
    %2 = arith.minsi %1, %c0_i32 : i32
    %c0_i32_0 = arith.constant 0 : i32
    %c0_i32_1 = arith.constant 0 : i32
    return %2, %c0_i32_0 : i32, i32
  }
  func.func @transform_2(%arg0: i32, %arg1: i32) -> (i32, i32) {
    %c0_i32 = arith.constant 0 : i32
    %c0_i32_0 = arith.constant 0 : i32
    %c0_i32_1 = arith.constant 0 : i32
    return %c0_i32, %c0_i32_0 : i32, i32
  }
  func.func @transform_3(%arg0: i32, %arg1: i32) -> (i32, i32) {
    %c0_i32 = arith.constant 0 : i32
    %c0_i32_0 = arith.constant 0 : i32
    %c0_i32_1 = arith.constant 0 : i32
    return %c0_i32, %c0_i32_0 : i32, i32
  }
  func.func @transform_4(%arg0: i32, %arg1: i32) -> (i32, i32, i32) {
    %c0_i32 = arith.constant 0 : i32
    %c0_i32_0 = arith.constant 0 : i32
    %c0_i32_1 = arith.constant 0 : i32
    return %arg0, %c0_i32, %c0_i32_0 : i32, i32, i32
  }
  func.func @transform_5(%arg0: i32, %arg1: i32) -> (i32, i32, i32) {
    %c0_i32 = arith.constant 0 : i32
    %c0_i32_0 = arith.constant 0 : i32
    %c0_i32_1 = arith.constant 0 : i32
    return %arg0, %c0_i32, %c0_i32_0 : i32, i32, i32
  }
}

</mosaic_0001>

<llo_original>
// kernel: tpu_custom_call.1
$region0: #{tpu_custom_call.1}
  #allocation0 [shape = 'u32[]', space=smem, size = 0x4, offset = 0x4, fixed_abs, tag = 'smem constant byte address 0x4 - core index']
  #allocation1 [shape = 'u32[144,128]{1,0:T(1,128)}', space=vmem, size = 0x12000, scoped, tag = 'internal scratch']
  #allocation2 [shape = 'f32[8,128]{1,0:T(8,128)}', space=vmem, size = 0x1000, scoped, tag = 'scratch operand']
  %s0 = inlined_call_operand.hbm [shape: f32[16,128], index: 0, kind: input, shape index: {}]
  %s1 = inlined_call_operand.hbm [shape: f32[16,128], index: 1, kind: input, shape index: {}]
  %s2 = inlined_call_operand.hbm [shape: f32[8,128], index: 2, kind: input, shape index: {}]
  %s3 = inlined_call_operand.vmem [shape: f32[8,128], index: 3, kind: input, shape index: {}]
  %s4 = inlined_call_operand.hbm [shape: f32[2,8,128], index: 4, kind: output, shape index: {0}]
  %s5 = inlined_call_operand.hbm [shape: f32[2,8,128], index: 5, kind: output, shape index: {1}]
  %6 = xla_tuple %s4, %s5
  %s7 = sld [smem:[#allocation0]]
  $region89: #{tpu_custom_call.1} parent=0
    _
  %s9 = ssub.s32 1, %s7
  %s10 = scalar_select 0, %s9, %s7
  $region1: #{tpu_custom_call.1} parent=0
    #allocation3 [shape = 'u8[16384]{0}', space=vmem, size = 0x4000, scoped, tag = 'input window, operand 0']
    #allocation4 [shape = 's32[2]{0}', space=sflag, size = 0x8, scoped, tag = 'scoped memory for tpu_custom_call.1']
    #allocation5 [shape = 's32[2]{0}', space=sflag, size = 0x8, scoped, tag = 'scoped memory for tpu_custom_call.1']
    #allocation6 [shape = 'u8[16384]{0}', space=vmem, size = 0x4000, scoped, tag = 'input window, operand 1']
    #allocation7 [shape = 's32[2]{0}', space=sflag, size = 0x8, scoped, tag = 'scoped memory for tpu_custom_call.1']
    #allocation8 [shape = 'u8[4096]{0}', space=vmem, size = 0x1000, scoped, tag = 'input window, operand 2, single buffered']
    #allocation9 [shape = 'u8[8192]{0}', space=vmem, size = 0x2000, scoped, tag = 'output window, operand 0']
    #allocation10 [shape = 'u8[8192]{0}', space=vmem, size = 0x2000, scoped, tag = 'output window, operand 1']
    #allocation11 [shape = 's32[2]{0}', space=sflag, size = 0x8, scoped, tag = 'scoped memory for tpu_custom_call.1']
    %11 = vsyncpa [#allocation4], 0
    %s12 = scalar_lea.sflag [#allocation4], 1
    %13 = vsyncpa %s12, 0
    %14 = vsyncpa [#allocation7], 0
    %s15 = scalar_lea.sflag [#allocation7], 1
    %16 = vsyncpa %s15, 0
    %17 = vsyncpa [#allocation5], 0
    %s18 = scalar_lea.sflag [#allocation5], 1
    %19 = vsyncpa %s18, 0
    %20 = vsyncpa [#allocation11], 0
    %s21 = scalar_lea.sflag [#allocation11], 1
    %22 = vsyncpa %s21, 0
    loop: start=0, step=1, limit=4
    $region2: #{tpu_custom_call.1} parent=1 // loop_pre_header
      _
    $region3: #{tpu_custom_call.1} parent=1 // loop_header
      %s24 = sphi 0, %s28
      %p25 = scmp.ge.s32.totalorder %s24, 4
      %s31 = sphi 0, %s43
      %s32 = sphi 0, %s39
      %s33 = sphi 0, %s31
      %s34 = sphi 0, %s32
      %s35 = sphi 0, %s33
      %s36 = sphi 0, %s34
      %s52 = sphi 0, %s54
      %s55 = sphi 0, %s52
      %s56 = sphi 0, %s55
      %s72 = sphi 0, %s56
      %s84 = sphi 0, %s86
      %s87 = sphi 0, %s84
      %s88 = sphi 0, %s87
      %s104 = sphi 0, %s88
      %s108 = sphi 0, %s108
      %s110 = sphi 0, %s108
      %s111 = sphi 0, %s110
      %s125 = sphi 0, %s111
      %s129 = sphi 0, %s129
      %s131 = sphi 0, %s129
      %s132 = sphi 0, %s131
      %s146 = sphi 0, %s132
      %s152 = sphi 0, %s154
      %s155 = sphi 0, %s152
      %s156 = sphi 0, %s155
      %s172 = sphi 0, %s156
      %s178 = sphi 0, %s180
      %s181 = sphi 0, %s178
      %s182 = sphi 0, %s181
      %s198 = sphi 0, %s182
    $region4: #{tpu_custom_call.1} parent=1 // loop_header_branch
      %27 = sbr.rel (%p25) target = $region8
    $region5: #{tpu_custom_call.1} parent=1 // loop_body
      %s29 = ssub.s32 %s24, 1
      %s30 = ssub.s32 %s24, 2
      %s37 = sadd.s32 1, %s32
      %p38 = scmp.ge.s32.totalorder %s37, 1
      %s39 = scalar_select %p38, 0, %s37
      %s40 = sadd.s32 1, %s31
      %s41 = scalar_select %p38, %s40, %s31
      %p42 = scmp.ge.s32.totalorder %s41, 2
      %s43 = scalar_select %p42, 0, %s41
      %s44 = sadd.s32 %s31, %s32
      %p45 = scmp.lt.s32.totalorder %s44, 0
      %s46 = scalar_select %p45, %s44, 0
      %s47 = sadd.s32 %s43, %s39
      %p48 = scmp.lt.s32.totalorder %s47, 0
      %s49 = scalar_select %p48, %s47, 0
      %s50 = ssub.s32 %s46, %s49
      %p51 = scmp.eq.s32.totalorder %s50, 0
      %s53 = sadd.s32 %s52, 1
      %s54 = scalar_select %p51, %s52, %s53
      %p57 = pneg %p51
      %p58 = scmp.eq.s32.totalorder %s24, 1
      %p59 = por %p57, %p58
      %p60 = scmp.ne.s32.totalorder %s52, %s55
      %p61 = scmp.eq.s32.totalorder %s24, 0
      %p62 = por %p60, %p61
      %p63 = scmp.ne.s32.totalorder %s52, %s55
      %p64 = scmp.eq.s32.totalorder %s29, 1
      %p65 = por %p63, %p64
      %p66 = scmp.ne.s32.totalorder %s55, %s56
      %p67 = scmp.eq.s32.totalorder %s29, 0
      %p68 = por %p66, %p67
      %p69 = scmp.ne.s32.totalorder %s55, %s56
      %p70 = scmp.eq.s32.totalorder %s30, 1
      %p71 = por %p69, %p70
      %p73 = scmp.ne.s32.totalorder %s56, %s72
      %p74 = scmp.eq.s32.totalorder %s30, 0
      %p75 = por %p73, %p74
      %s76 = sadd.s32 %s31, %s32
      %p77 = scmp.lt.s32.totalorder %s76, 0
      %s78 = scalar_select %p77, %s76, 0
      %s79 = sadd.s32 %s43, %s39
      %p80 = scmp.lt.s32.totalorder %s79, 0
      %s81 = scalar_select %p80, %s79, 0
      %s82 = ssub.s32 %s78, %s81
      %p83 = scmp.eq.s32.totalorder %s82, 0
      %s85 = sadd.s32 %s84, 1
      %s86 = scalar_select %p83, %s84, %s85
      %p89 = pneg %p83
      %p90 = scmp.eq.s32.totalorder %s24, 1
      %p91 = por %p89, %p90
      %p92 = scmp.ne.s32.totalorder %s84, %s87
      %p93 = scmp.eq.s32.totalorder %s24, 0
      %p94 = por %p92, %p93
      %p95 = scmp.ne.s32.totalorder %s84, %s87
      %p96 = scmp.eq.s32.totalorder %s29, 1
      %p97 = por %p95, %p96
      %p98 = scmp.ne.s32.totalorder %s87, %s88
      %p99 = scmp.eq.s32.totalorder %s29, 0
      %p100 = por %p98, %p99
      %p101 = scmp.ne.s32.totalorder %s87, %s88
      %p102 = scmp.eq.s32.totalorder %s30, 1
      %p103 = por %p101, %p102
      %p105 = scmp.ne.s32.totalorder %s88, %s104
      %p106 = scmp.eq.s32.totalorder %s30, 0
      %p107 = por %p105, %p106
      %s109 = sadd.s32 %s108, 1
      %p112 = scmp.eq.s32.totalorder %s24, 1
      %p113 = scmp.ne.s32.totalorder %s108, %s110
      %p114 = scmp.eq.s32.totalorder %s24, 0
      %p115 = por %p113, %p114
      %p116 = scmp.ne.s32.totalorder %s108, %s110
      %p117 = scmp.eq.s32.totalorder %s29, 1
      %p118 = por %p116, %p117
      %p119 = scmp.ne.s32.totalorder %s110, %s111
      %p120 = scmp.eq.s32.totalorder %s29, 0
      %p121 = por %p119, %p120
      %p122 = scmp.ne.s32.totalorder %s110, %s111
      %p123 = scmp.eq.s32.totalorder %s30, 1
      %p124 = por %p122, %p123
      %p126 = scmp.ne.s32.totalorder %s111, %s125
      %p127 = scmp.eq.s32.totalorder %s30, 0
      %p128 = por %p126, %p127
      %s130 = sadd.s32 %s129, 1
      %p133 = scmp.eq.s32.totalorder %s24, 1
      %p134 = scmp.ne.s32.totalorder %s129, %s131
      %p135 = scmp.eq.s32.totalorder %s24, 0
      %p136 = por %p134, %p135
      %p137 = scmp.ne.s32.totalorder %s129, %s131
      %p138 = scmp.eq.s32.totalorder %s29, 1
      %p139 = por %p137, %p138
      %p140 = scmp.ne.s32.totalorder %s131, %s132
      %p141 = scmp.eq.s32.totalorder %s29, 0
      %p142 = por %p140, %p141
      %p143 = scmp.ne.s32.totalorder %s131, %s132
      %p144 = scmp.eq.s32.totalorder %s30, 1
      %p145 = por %p143, %p144
      %p147 = scmp.ne.s32.totalorder %s132, %s146
      %p148 = scmp.eq.s32.totalorder %s30, 0
      %p149 = por %p147, %p148
      %s150 = ssub.s32 %s31, %s43
      %p151 = scmp.eq.s32.totalorder %s150, 0
      %s153 = sadd.s32 %s152, 1
      %s154 = scalar_select %p151, %s152, %s153
      %p157 = pneg %p151
      %p158 = scmp.eq.s32.totalorder %s24, 1
      %p159 = por %p157, %p158
      %p160 = scmp.ne.s32.totalorder %s152, %s155
      %p161 = scmp.eq.s32.totalorder %s24, 0
      %p162 = por %p160, %p161
      %p163 = scmp.ne.s32.totalorder %s152, %s155
      %p164 = scmp.eq.s32.totalorder %s29, 1
      %p165 = por %p163, %p164
      %p166 = scmp.ne.s32.totalorder %s155, %s156
      %p167 = scmp.eq.s32.totalorder %s29, 0
      %p168 = por %p166, %p167
      %p169 = scmp.ne.s32.totalorder %s155, %s156
      %p170 = scmp.eq.s32.totalorder %s30, 1
      %p171 = por %p169, %p170
      %p173 = scmp.ne.s32.totalorder %s156, %s172
      %p174 = scmp.eq.s32.totalorder %s30, 0
      %p175 = por %p173, %p174
      %s176 = ssub.s32 %s31, %s43
      %p177 = scmp.eq.s32.totalorder %s176, 0
      %s179 = sadd.s32 %s178, 1
      %s180 = scalar_select %p177, %s178, %s179
      %p183 = pneg %p177
      %p184 = scmp.eq.s32.totalorder %s24, 1
      %p185 = por %p183, %p184
      %p186 = scmp.ne.s32.totalorder %s178, %s181
      %p187 = scmp.eq.s32.totalorder %s24, 0
      %p188 = por %p186, %p187
      %p189 = scmp.ne.s32.totalorder %s178, %s181
      %p190 = scmp.eq.s32.totalorder %s29, 1
      %p191 = por %p189, %p190
      %p192 = scmp.ne.s32.totalorder %s181, %s182
      %p193 = scmp.eq.s32.totalorder %s29, 0
      %p194 = por %p192, %p193
      %p195 = scmp.ne.s32.totalorder %s181, %s182
      %p196 = scmp.eq.s32.totalorder %s30, 1
      %p197 = por %p195, %p196
      %p199 = scmp.ne.s32.totalorder %s182, %s198
      %p200 = scmp.eq.s32.totalorder %s30, 0
      %p201 = por %p199, %p200
      %p202 = scmp.le.s32.totalorder 1, %s24
      %p203 = scmp.lt.s32.totalorder %s24, 3
      %p204 = pnand %p202, %p203
      %p205 = pneg %p204
      // Predicated region
      $region9: #{tpu_custom_call.1} parent=5 // pred_check
        _
      $region10: #{tpu_custom_call.1} parent=5 // pred_check_branch
        %207 = sbr.rel (%p204) target = $region12
      $region11: #{tpu_custom_call.1} parent=5 // pred_region
        %s208 = ssub.s32 %s24, 1
        // Predicated region
        $region13: #{tpu_custom_call.1} parent=11 // pred_check
          %p209 = pneg %p121
        $region14: #{tpu_custom_call.1} parent=11 // pred_check_branch
          %211 = sbr.rel (%p209) target = $region16
        $region15: #{tpu_custom_call.1} parent=11 // pred_region
          %s213 = ssub.s32 128, 128
          %214 = vsyncadd [#allocation7], %s213
          %s216 = sshll.u32 [#allocation8], 4
          %s217 = int_to_ptr.vmem [resolvable:$true] %s216
          %219 = dma.hbm_to_vmem [thread:$0]  %s2, 128, %s217, [#allocation7]
        $region16: #{tpu_custom_call.1} parent=11 // pred_fallthru
          _
        // Predicated region
        $region17: #{tpu_custom_call.1} parent=11 // pred_check
          %p220 = pneg %p142
        $region18: #{tpu_custom_call.1} parent=11 // pred_check_branch
          %222 = sbr.rel (%p220) target = $region20
        $region19: #{tpu_custom_call.1} parent=11 // pred_region
          _
        $region20: #{tpu_custom_call.1} parent=11 // pred_fallthru
          _
      $region12: #{tpu_custom_call.1} parent=5 // pred_fallthru
        _
      %p223 = scmp.lt.s32.totalorder %s24, 2
      // Predicated region
      $region21: #{tpu_custom_call.1} parent=5 // pred_check
        %p224 = pneg %p223
      $region22: #{tpu_custom_call.1} parent=5 // pred_check_branch
        %226 = sbr.rel (%p224) target = $region24
      $region23: #{tpu_custom_call.1} parent=5 // pred_region
        // Predicated region
        $region25: #{tpu_custom_call.1} parent=23 // pred_check
          %p227 = pneg %p62
        $region26: #{tpu_custom_call.1} parent=23 // pred_check_branch
          %229 = sbr.rel (%p227) target = $region28
        $region27: #{tpu_custom_call.1} parent=23 // pred_region
          %s230 = sand.u32 %s52, 1
          %s231 = scalar_lea.sflag [#allocation4], %s230
          %s232 = sand.u32 %s52, 1
          %s233 = smul.addr %s232, 16
          %s234 = scalar_lea.vmem [#allocation3], %s233
          %s235 = sadd.s32 %s31, %s32
          %p236 = scmp.lt.s32.totalorder %s235, 0
          %s237 = scalar_select %p236, %s235, 0
          %s238 = smul.u32 2, %s237
          %s240 = ssub.s32 256, 256
          %241 = vsyncadd %s231, %s240
          %s242 = smul.addr %s238, 128
          %s243 = scalar_lea.hbm %s0, %s242
          %s244 = sshll.u32 %s234, 4
          %s245 = int_to_ptr.vmem [resolvable:$true] %s244
          %250 = dma.hbm_to_vmem [thread:$0]  %s243, 256, %s245, %s231, 128, 128, 8
        $region28: #{tpu_custom_call.1} parent=23 // pred_fallthru
          _
        // Predicated region
        $region29: #{tpu_custom_call.1} parent=23 // pred_check
          %p251 = pneg %p94
        $region30: #{tpu_custom_call.1} parent=23 // pred_check_branch
          %253 = sbr.rel (%p251) target = $region32
        $region31: #{tpu_custom_call.1} parent=23 // pred_region
          %s254 = sand.u32 %s24, 1
          %s255 = scalar_lea.sflag [#allocation7], %s254
          %s256 = sand.u32 %s84, 1
          %s257 = smul.addr %s256, 16
          %s258 = scalar_lea.vmem [#allocation6], %s257
          %s259 = sadd.s32 %s31, %s32
          %p260 = scmp.lt.s32.totalorder %s259, 0
          %s261 = scalar_select %p260, %s259, 0
          %s262 = smul.u32 2, %s261
          %s264 = ssub.s32 256, 256
          %265 = vsyncadd %s255, %s264
          %s266 = smul.addr %s262, 128
          %s267 = scalar_lea.hbm %s1, %s266
          %s268 = sshll.u32 %s258, 4
          %s269 = int_to_ptr.vmem [resolvable:$true] %s268
          %274 = dma.hbm_to_vmem [thread:$0]  %s267, 256, %s269, %s255, 128, 128, 8
        $region32: #{tpu_custom_call.1} parent=23 // pred_fallthru
          _
      $region24: #{tpu_custom_call.1} parent=5 // pred_fallthru
        _
      %p275 = scmp.le.s32.totalorder 1, %s24
      %p276 = scmp.lt.s32.totalorder %s24, 3
      %p277 = pnand %p275, %p276
      %p278 = pneg %p277
      // Predicated region
      $region33: #{tpu_custom_call.1} parent=5 // pred_check
        _
      $region34: #{tpu_custom_call.1} parent=5 // pred_check_branch
        %280 = sbr.rel (%p277) target = $region36
      $region35: #{tpu_custom_call.1} parent=5 // pred_region
        %s281 = ssub.s32 %s24, 1
        %s282 = sand.u32 %s55, 1
        %s283 = scalar_lea.sflag [#allocation4], %s282
        %s284 = sand.u32 %s55, 1
        %s285 = smul.addr %s284, 16
        %s286 = scalar_lea.vmem [#allocation3], %s285
        // Predicated region
        $region37: #{tpu_custom_call.1} parent=35 // pred_check
          %p287 = pneg %p68
        $region38: #{tpu_custom_call.1} parent=35 // pred_check_branch
          %289 = sbr.rel (%p287) target = $region40
        $region39: #{tpu_custom_call.1} parent=35 // pred_region
          %290 = dma.done %s283, 256
        $region40: #{tpu_custom_call.1} parent=35 // pred_fallthru
          _
        %s291 = sand.u32 %s29, 1
        %s292 = scalar_lea.sflag [#allocation7], %s291
        %s293 = sand.u32 %s87, 1
        %s294 = smul.addr %s293, 16
        %s295 = scalar_lea.vmem [#allocation6], %s294
        // Predicated region
        $region41: #{tpu_custom_call.1} parent=35 // pred_check
          %p296 = pneg %p100
        $region42: #{tpu_custom_call.1} parent=35 // pred_check_branch
          %298 = sbr.rel (%p296) target = $region44
        $region43: #{tpu_custom_call.1} parent=35 // pred_region
          %299 = dma.done %s292, 256
        $region44: #{tpu_custom_call.1} parent=35 // pred_fallthru
          _
        // Predicated region
        $region45: #{tpu_custom_call.1} parent=35 // pred_check
          %p300 = pneg %p121
        $region46: #{tpu_custom_call.1} parent=35 // pred_check_branch
          %302 = sbr.rel (%p300) target = $region48
        $region47: #{tpu_custom_call.1} parent=35 // pred_region
          %303 = dma.done [#allocation7], 128
        $region48: #{tpu_custom_call.1} parent=35 // pred_fallthru
          _
        %s304 = sand.u32 %s55, 1
        %s305 = scalar_lea.sflag [#allocation4], %s304
        %s306 = sand.u32 %s55, 1
        %s307 = smul.addr %s306, 16
        %s308 = scalar_lea.vmem [#allocation3], %s307
        %p309 = pneg %p68
        %p310 = pneg %p65
        %s311 = sand.u32 %s29, 1
        %s312 = scalar_lea.sflag [#allocation7], %s311
        %s313 = sand.u32 %s87, 1
        %s314 = smul.addr %s313, 16
        %s315 = scalar_lea.vmem [#allocation6], %s314
        %p316 = pneg %p100
        %p317 = pneg %p97
        %p318 = pneg %p121
        %p319 = pneg %p118
        %p320 = pneg %p142
        %p321 = pneg %p139
        %p322 = pneg %p168
        %p323 = pneg %p165
        %s324 = sand.u32 %s155, 1
        %s325 = scalar_lea.sflag [#allocation5], %s324
        %s326 = sand.u32 %s155, 1
        %s327 = smul.addr %s326, 8
        %s328 = scalar_lea.vmem [#allocation9], %s327
        %p329 = pneg %p194
        %p330 = pneg %p191
        %s331 = sand.u32 %s181, 1
        %s332 = scalar_lea.sflag [#allocation11], %s331
        %s333 = sand.u32 %s181, 1
        %s334 = smul.addr %s333, 8
        %s335 = scalar_lea.vmem [#allocation10], %s334
        %s336 = sadd.s32 %s33, %s34
        %p337 = scmp.lt.s32.totalorder %s336, 0
        %s338 = scalar_select %p337, %s336, 0
        %s339 = smul.u32 2, %s338
        %s340 = sadd.s32 %s33, %s34
        %p341 = scmp.lt.s32.totalorder %s340, 0
        %s342 = scalar_select %p341, %s340, 0
        %s343 = smul.u32 2, %s342
        %s344 = sadd.s32 %s33, %s34
        %p345 = scmp.eq.s32.totalorder %s34, 0
        // Predicated region
        $region49: #{tpu_custom_call.1} parent=35 // pred_check
          %p346 = pneg %p345
        $region50: #{tpu_custom_call.1} parent=35 // pred_check_branch
          %348 = sbr.rel (%p346) target = $region52
        $region51: #{tpu_custom_call.1} parent=35 // pred_region
          %349 = vst [vmem:[#allocation2] sm:$0xff] 0.0
        $region52: #{tpu_custom_call.1} parent=35 // pred_fallthru
          _
        %p350 = scmp.eq.s32.totalorder %s33, 0
        %p351 = pnand %p350, %p345
        %p352 = pneg %p351
        // Predicated region
        $region53: #{tpu_custom_call.1} parent=35 // pred_check
          _
        $region54: #{tpu_custom_call.1} parent=35 // pred_check_branch
          %354 = sbr.rel (%p351) target = $region56
        $region55: #{tpu_custom_call.1} parent=35 // pred_region
          %v355 = vld [vmem:[#allocation8] sm:$0xff]
          %v356 = vld [vmem:[%s3] sm:$0xff]
          %v357 = vmul.f32 %v355, %v355
          %v358 = vsub.f32 0.0, %v357
          %v359 = vmul.f32 %v356, 1.442695
          %v360 = vpow.pop %v359
          %v361 = vsub.f32 %v358, %v360
          %v362 = vadd.f32 %v361, 1.0
          %v363 = vadd.f32 %v362, %v356
          %v364 = vmul.f32 %v363, -0.5
          %v365 = vadd.f32 %v364, 0.0
          %366 = vst [vmem:[%s335] sm:$0xff] %v365
        $region56: #{tpu_custom_call.1} parent=35 // pred_fallthru
          _
        %v367 = vld [vmem:[%s295] sm:$0xff]
        %v368 = vld [vmem:[%s295 + $0x8] sm:$0xff]
        %v369 = vld [vmem:[%s286] sm:$0xff]
        %v370 = vld [vmem:[%s286 + $0x8] sm:$0xff]
        %v371 = vsub.f32 %v367, %v369
        %v372 = vsub.f32 %v368, %v370
        %v373 = vmul.f32 %v371, %v371
        %v374 = vmul.f32 %v372, %v372
        %p375 = scmp.lt.s32.totalorder %s344, 1
        // Predicated region
        $region57: #{tpu_custom_call.1} parent=35 // pred_check
          %p376 = pneg %p375
        $region58: #{tpu_custom_call.1} parent=35 // pred_check_branch
          %378 = sbr.rel (%p376) target = $region60
        $region59: #{tpu_custom_call.1} parent=35 // pred_region
          %v379 = vld [vmem:[#allocation2] sm:$0xff]
          %v380 = vadd.f32 %v373, %v374
          %v381 = vadd.f32 %v379, %v380
          %382 = vst [vmem:[#allocation2] sm:$0xff] %v381
        $region60: #{tpu_custom_call.1} parent=35 // pred_fallthru
          _
        %p383 = scmp.ge.s32.totalorder %s344, 1
        // Predicated region
        $region61: #{tpu_custom_call.1} parent=35 // pred_check
          %p384 = pneg %p383
        $region62: #{tpu_custom_call.1} parent=35 // pred_check_branch
          %386 = sbr.rel (%p384) target = $region64
        $region63: #{tpu_custom_call.1} parent=35 // pred_region
          %s387 = smul.u32 %s344, 16
          %s388 = ssub.s32 16, %s387
          %v389 = vlaneseq
          %v390 = vshrl.u32 %v389, 7
          %v391 = vadd.s32 %v390, 8
          %v392 = vstv %s388
          %vm393 = vcmp.lt.s32.totalorder %v390, %v392
          %vm394 = vcmp.lt.s32.totalorder %v391, %v392
          %v395 = vsel %vm393, %v373, 0.0
          %v396 = vsel %vm394, %v374, 0.0
          %v397 = vld [vmem:[#allocation2] sm:$0xff]
          %v398 = vadd.f32 %v395, %v396
          %v399 = vadd.f32 %v397, %v398
          %400 = vst [vmem:[#allocation2] sm:$0xff] %v399
        $region64: #{tpu_custom_call.1} parent=35 // pred_fallthru
          _
        // Predicated region
        $region65: #{tpu_custom_call.1} parent=35 // pred_check
          %p401 = pneg %p345
        $region66: #{tpu_custom_call.1} parent=35 // pred_check_branch
          %403 = sbr.rel (%p401) target = $region68
        $region67: #{tpu_custom_call.1} parent=35 // pred_region
          %v404 = vld [vmem:[#allocation2] sm:$0xff]
          %405 = vst [vmem:[%s328] sm:$0xff] %v404
        $region68: #{tpu_custom_call.1} parent=35 // pred_fallthru
          _
        %s406 = sand.u32 %s155, 1
        %s407 = scalar_lea.sflag [#allocation5], %s406
        %s408 = sand.u32 %s155, 1
        %s409 = smul.addr %s408, 8
        %s410 = scalar_lea.vmem [#allocation9], %s409
        %s411 = sand.u32 %s181, 1
        %s412 = scalar_lea.sflag [#allocation11], %s411
        %s413 = sand.u32 %s181, 1
        %s414 = smul.addr %s413, 8
        %s415 = scalar_lea.vmem [#allocation10], %s414
        // Predicated region
        $region69: #{tpu_custom_call.1} parent=35 // pred_check
          %p416 = pneg %p165
        $region70: #{tpu_custom_call.1} parent=35 // pred_check_branch
          %418 = sbr.rel (%p416) target = $region72
        $region71: #{tpu_custom_call.1} parent=35 // pred_region
          %s420 = ssub.s32 128, 128
          %421 = vsyncadd %s407, %s420
          %s422 = smul.addr %s33, 128
          %s423 = scalar_lea.hbm %s4, %s422
          %s425 = sshll.u32 %s410, 4
          %s426 = int_to_ptr.vmem [resolvable:$true] %s425
          %428 = dma.vmem_to_hbm [thread:$0]  %s426, 128, %s423, %s407
        $region72: #{tpu_custom_call.1} parent=35 // pred_fallthru
          _
        // Predicated region
        $region73: #{tpu_custom_call.1} parent=35 // pred_check
          %p429 = pneg %p191
        $region74: #{tpu_custom_call.1} parent=35 // pred_check_branch
          %431 = sbr.rel (%p429) target = $region76
        $region75: #{tpu_custom_call.1} parent=35 // pred_region
          %s433 = ssub.s32 128, 128
          %434 = vsyncadd %s412, %s433
          %s435 = smul.addr %s33, 128
          %s436 = scalar_lea.hbm %s5, %s435
          %s438 = sshll.u32 %s415, 4
          %s439 = int_to_ptr.vmem [resolvable:$true] %s438
          %441 = dma.vmem_to_hbm [thread:$0]  %s439, 128, %s436, %s412
        $region76: #{tpu_custom_call.1} parent=35 // pred_fallthru
          _
      $region36: #{tpu_custom_call.1} parent=5 // pred_fallthru
        _
      %p442 = scmp.le.s32.totalorder 2, %s24
      // Predicated region
      $region77: #{tpu_custom_call.1} parent=5 // pred_check
        %p443 = pneg %p442
      $region78: #{tpu_custom_call.1} parent=5 // pred_check_branch
        %445 = sbr.rel (%p443) target = $region80
      $region79: #{tpu_custom_call.1} parent=5 // pred_region
        %s446 = ssub.s32 %s24, 2
        // Predicated region
        $region81: #{tpu_custom_call.1} parent=79 // pred_check
          %p447 = pneg %p171
        $region82: #{tpu_custom_call.1} parent=79 // pred_check_branch
          %449 = sbr.rel (%p447) target = $region84
        $region83: #{tpu_custom_call.1} parent=79 // pred_region
          %s450 = sand.u32 %s156, 1
          %s451 = scalar_lea.sflag [#allocation5], %s450
          %s452 = sand.u32 %s156, 1
          %s453 = smul.addr %s452, 8
          %s454 = scalar_lea.vmem [#allocation9], %s453
          %455 = dma.done %s451, 128
        $region84: #{tpu_custom_call.1} parent=79 // pred_fallthru
          _
        // Predicated region
        $region85: #{tpu_custom_call.1} parent=79 // pred_check
          %p456 = pneg %p197
        $region86: #{tpu_custom_call.1} parent=79 // pred_check_branch
          %458 = sbr.rel (%p456) target = $region88
        $region87: #{tpu_custom_call.1} parent=79 // pred_region
          %s459 = sand.u32 %s182, 1
          %s460 = scalar_lea.sflag [#allocation11], %s459
          %s461 = sand.u32 %s182, 1
          %s462 = smul.addr %s461, 8
          %s463 = scalar_lea.vmem [#allocation10], %s462
          %464 = dma.done %s460, 128
        $region88: #{tpu_custom_call.1} parent=79 // pred_fallthru
          _
      $region80: #{tpu_custom_call.1} parent=5 // pred_fallthru
        _
    $region6: #{tpu_custom_call.1} parent=1 // loop_footer
      %s28 = sadd.s32 1, %s24
    $region7: #{tpu_custom_call.1} parent=1 // loop_footer_branch
      %23 = sbr.rel target = $region3
    $region8: #{tpu_custom_call.1} parent=1 // loop_exit
      _
    %465 = vsyncpa [#allocation4], 1
    %s466 = scalar_lea.sflag [#allocation4], 1
    %467 = vsyncpa %s466, 1
    %468 = vsyncpa [#allocation7], 1
    %s469 = scalar_lea.sflag [#allocation7], 1
    %470 = vsyncpa %s469, 1
    %471 = vsyncpa [#allocation5], 1
    %s472 = scalar_lea.sflag [#allocation5], 1
    %473 = vsyncpa %s472, 1
    %474 = vsyncpa [#allocation11], 1
    %s475 = scalar_lea.sflag [#allocation11], 1
    %476 = vsyncpa %s475, 1

</llo_original>
